<compile_context>
chip_gen: v5e
topology: v5e:2x2
jax: 0.10.0
libtpu: 0.0.40
codegen_flags: <defaults>
</compile_context>

<pallas_src>
import functools

import jax
import jax.numpy as jnp
from jax import lax
from jax.experimental import pallas as pl
from jax.experimental.pallas import tpu as pltpu

BN_EPS = 1e-5
_MAX_SPATIAL_TILE = 8192   # lanes per tile; beyond this, per-step overhead is noise
_MAX_BATCH_BLOCK = 8       # kernel statically unrolls over this - keep small


def _round_up(x, m):
    return (x + m - 1) // m * m


def _vmem_capacity_bytes():
    """Physical VMEM of the current TPU generation; conservative fallback."""
    try:
        cap = getattr(pltpu.get_tpu_info(), "vmem_capacity_bytes", None)
        if cap:
            return int(cap)
    except Exception:
        pass
    return 64 << 20   # v7x has the smallest per-TC VMEM; safe on all generations


def _choose_tiles(n, cin, cout, hw, data_budget_bytes):
    """Pick (bn, tl, hw_pad): batch block, 128-multiple spatial tile, padded HW."""
    # Double-buffered x block + out block dominate VMEM:
    #   2 buffers * 4 B * bn * tl * (cin + cout)
    cap_elems = max(128, data_budget_bytes // (2 * 4 * (cin + cout)))
    hw128 = _round_up(hw, 128)
    cap = max(128, min((cap_elems // 128) * 128, _MAX_SPATIAL_TILE, hw128))
    # Prefer a tile that divides the 128-rounded HW (no extra padding) unless
    # that forces a tile much smaller than the cap; then take the cap and pad.
    tl_div = 128
    t = cap
    while t >= 128:
        if hw128 % t == 0:
            tl_div = t
            break
        t -= 128
    tl = tl_div if tl_div * 4 >= cap else cap
    hw_pad = _round_up(hw, tl)
    # Fold batch elements until the per-step payload hits the budget.
    bn = 1
    rem = max(1, cap_elems // tl)
    for d in range(min(n, _MAX_BATCH_BLOCK, rem), 0, -1):
        if n % d == 0:
            bn = d
            break
    return bn, tl, hw_pad


def _stats_kernel(x_ref, sx_ref, sxx_ref):
    """Partial input moments for this block: Sx and Sxx = X @ X^T."""
    bn = x_ref.shape[0]
    sx = None
    sxx = None
    for b in range(bn):                                   # bn <= 8, static unroll
        xb = x_ref[b]                                     # (cin, tl)
        sxb = jnp.sum(xb, axis=1, keepdims=True)          # (cin, 1)   XLU reduce
        sxxb = jnp.einsum("ct,dt->cd", xb, xb,            # (cin, cin) MXU
                          preferred_element_type=jnp.float32)
        sx = sxb if sx is None else sx + sxb
        sxx = sxxb if sxx is None else sxx + sxxb
    sx_ref[0, 0] = sx
    sxx_ref[0, 0] = sxx


def _apply_kernel(x_ref, w_ref, scale_ref, shift_ref, o_ref, *, use_vpu_mac):
    """Fused 1x1 conv + BN affine + ReLU on one (bn, cin, tl) tile."""
    w = w_ref[...]                      # (cout, cin), resident across the grid
    scale = scale_ref[...]              # (cout, 1) fused BN scale
    shift = shift_ref[...]              # (cout, 1) fused BN shift
    cin = w.shape[1]
    if use_vpu_mac:
        # Tiny Cin: the MXU would run nearly idle; a short VPU MAC chain is
        # cheaper.  Weight columns hoisted out of the batch loop (JAX does not
        # CSE broadcasts).  TODO(synk): sweep the crossover per generation.
        w_cols = [w[:, c:c + 1] for c in range(cin)]
    for b in range(x_ref.shape[0]):     # bn <= 8, static unroll
        xb = x_ref[b]                   # (cin, tl)
        if use_vpu_mac:
            y = w_cols[0] * xb[0:1, :]
            for c in range(1, cin):
                y = y + w_cols[c] * xb[c:c + 1, :]
        else:
            y = jnp.dot(w, xb, preferred_element_type=jnp.float32)
        o_ref[b] = jnp.maximum(y * scale + shift, 0.0).astype(o_ref.dtype)


def conv2d_bn_relu(x_nchw, weight, bias, gamma, beta):
    """Forward of Conv2d(1x1, stride 1, bias) -> BatchNorm2d(train) -> ReLU.

    x_nchw: (N, Cin, H, W) f32; weight: (Cout, Cin, 1, 1) or (Cout, Cin);
    bias/gamma/beta: (Cout,).  The conv bias is accepted for API parity but is
    cancelled exactly by training-mode BN mean subtraction, so it is never
    sent to the kernels.
    TODO(synk): general kernel_size/stride, if_bn=False and eval-mode BN
    (running stats) are out of scope for this kernel.
    """
    del bias  # (y + b) - mean(y + b) == y - mean(y) under training-mode BN

    n, cin, h, w = x_nchw.shape
    hw = h * w
    cout = weight.shape[0]
    w2d = weight.reshape(cout, cin).astype(jnp.float32)
    gamma = gamma.reshape(cout).astype(jnp.float32)
    beta = beta.reshape(cout).astype(jnp.float32)

    # Generation-aware VMEM budget (v7x: 64 MiB physical, v5e/v6e: 128 MiB).
    vmem_cap = _vmem_capacity_bytes()
    vmem_limit = int(vmem_cap * 0.75)
    data_budget = vmem_limit // 2   # headroom for weights + compiler scratch
    bn, tl, hw_pad = _choose_tiles(n, cin, cout, hw, data_budget)
    gb, gl = n // bn, hw_pad // tl

    # Permute-free reshape (no host transposes).  Pad the lane dim to a
    # multiple of the tile so output stores are lane-dense; zero padding
    # contributes 0 to the input moments so the BN stats stay exact.
    x3d = x_nchw.reshape(n, cin, hw).astype(jnp.float32)
    if hw_pad != hw:
        x3d = jnp.pad(x3d, ((0, 0), (0, 0), (0, hw_pad - hw)))

    x_spec = pl.BlockSpec((bn, cin, tl), lambda i, j: (i, 0, j))
    cparams = pltpu.CompilerParams(
        dimension_semantics=("parallel", "parallel"),
        vmem_limit_bytes=vmem_limit,
    )

    # ---- pass 0: partial input moments (pure streaming reduce over X) ----
    stats_cost = pl.CostEstimate(
        flops=int(n * hw_pad * cin * (2 * cin + 1)),
        transcendentals=0,
        bytes_accessed=int(4 * (n * cin * hw_pad + gb * gl * cin * (cin + 1))),
    )
    sx_part, sxx_part = pl.pallas_call(
        _stats_kernel,
        out_shape=(jax.ShapeDtypeStruct((gb, gl, cin, 1), jnp.float32),
                   jax.ShapeDtypeStruct((gb, gl, cin, cin), jnp.float32)),
        grid=(gb, gl),
        in_specs=[x_spec],
        out_specs=(pl.BlockSpec((1, 1, cin, 1), lambda i, j: (i, j, 0, 0)),
                   pl.BlockSpec((1, 1, cin, cin), lambda i, j: (i, j, 0, 0))),
        compiler_params=cparams,
        cost_estimate=stats_cost,
    )(x3d)

    # ---- finalize (tiny, O(cout*cin^2)): fused BN scale / shift ----
    count = float(n * hw)                                   # true, unpadded count
    mean_x = sx_part.sum(axis=(0, 1)).reshape(cin) / count  # (cin,)
    exx = sxx_part.sum(axis=(0, 1)) / count                 # (cin, cin)
    cov_x = exx - jnp.outer(mean_x, mean_x)
    # NOTE: raw-moment variance can cancel when |mean| >> std over huge N*H*W;
    # clamped here.  TODO(synk): shifted / two-pass variance for that regime.
    mean_y = w2d @ mean_x                                    # (cout,)
    var_y = jnp.maximum(jnp.einsum("oi,ij,oj->o", w2d, cov_x, w2d), 0.0)
    scale_vec = gamma * lax.rsqrt(var_y + BN_EPS)
    shift_vec = beta - mean_y * scale_vec
    scale = scale_vec.reshape(cout, 1)
    shift = shift_vec.reshape(cout, 1)

    # ---- pass 1: fused 1x1 conv + BN affine + ReLU (pure parallel map) ----
    use_vpu_mac = cin <= 8
    apply_cost = pl.CostEstimate(
        flops=int(n * hw_pad * cout * (2 * cin + 3)),
        transcendentals=0,
        bytes_accessed=int(4 * (n * (cin + cout) * hw_pad
                                + cout * cin + 2 * cout)),
    )
    out3d = pl.pallas_call(
        functools.partial(_apply_kernel, use_vpu_mac=use_vpu_mac),
        out_shape=jax.ShapeDtypeStruct((n, cout, hw_pad), jnp.float32),
        grid=(gb, gl),
        in_specs=[
            x_spec,
            pl.BlockSpec((cout, cin), lambda i, j: (0, 0)),   # W resident
            pl.BlockSpec((cout, 1), lambda i, j: (0, 0)),     # BN scale
            pl.BlockSpec((cout, 1), lambda i, j: (0, 0)),     # BN shift
        ],
        out_specs=pl.BlockSpec((bn, cout, tl), lambda i, j: (i, 0, j)),
        compiler_params=cparams,
        cost_estimate=apply_cost,
    )(x3d, w2d, scale, shift)
    # TODO(synk): for very large Cout, add a third "parallel" Cout grid axis
    # (channel blocks); per-channel scale/shift needs no cross-core reduce.

    out = out3d[:, :, :hw] if hw_pad != hw else out3d
    return out.reshape(n, cout, h, w)


if __name__ == "__main__":
    key = jax.random.PRNGKey(0)
    kx, kw, kb = jax.random.split(key, 3)

    N, CIN, COUT, H, W = 2, 4, 8, 16, 16

    x = jax.random.normal(kx, (N, CIN, H, W), dtype=jnp.float32)
    weight = 0.1 * jax.random.normal(kw, (COUT, CIN, 1, 1), dtype=jnp.float32)
    bias = 0.1 * jax.random.normal(kb, (COUT,), dtype=jnp.float32)
    gamma = jnp.ones((COUT,), dtype=jnp.float32)   # PyTorch BN affine defaults
    beta = jnp.zeros((COUT,), dtype=jnp.float32)

    out = conv2d_bn_relu(x, weight, bias, gamma, beta)
    jax.block_until_ready(out)

    # Pure-JAX reference (includes the conv bias to confirm training-mode BN
    # cancels it, exactly as the kernel assumes).
    w2d = weight.reshape(COUT, CIN)
    y_ref = jnp.einsum("oc,nchw->nohw", w2d, x) + bias[None, :, None, None]
    m = jnp.mean(y_ref, axis=(0, 2, 3), keepdims=True)
    v = jnp.mean((y_ref - m) ** 2, axis=(0, 2, 3), keepdims=True)
    y_ref = (y_ref - m) * lax.rsqrt(v + BN_EPS)
    y_ref = jnp.maximum(
        y_ref * gamma[None, :, None, None] + beta[None, :, None, None], 0.0)

    assert out.shape == (N, COUT, H, W)
    err = float(jnp.max(jnp.abs(out - y_ref)))
    assert jnp.allclose(out, y_ref, atol=1e-4, rtol=1e-4), err

    print("KERNEL_OK")
</pallas_src>

<mosaic_0001>
module attributes {stable_mosaic.version = 11 : i64} {
  func.func @_stats_kernel(%arg0: i32, %arg1: i32, %arg2: memref<2x4x256xf32, #tpu.memory_space<vmem>>, %arg3: memref<1x1x4x1xf32, #tpu.memory_space<vmem>>, %arg4: memref<1x1x4x4xf32, #tpu.memory_space<vmem>>) attributes {dimension_semantics = [#tpu.dimension_semantics<parallel>, #tpu.dimension_semantics<parallel>], iteration_bounds = array<i64: 1, 1>, scalar_prefetch = 0 : i64, scratch_operands = 0 : i64, tpu.core_type = #tpu.core_type<tc>, window_params = [{transform_indices = @transform_0, window_bounds = array<i64: 2, 4, 256>}, {transform_indices = @transform_1, window_bounds = array<i64: 1, 1, 4, 1>}, {transform_indices = @transform_2, window_bounds = array<i64: 1, 1, 4, 4>}]} {
    %c0 = arith.constant 0 : index
    %c0_0 = arith.constant 0 : index
    %c0_1 = arith.constant 0 : index
    %0 = vector.load %arg2[%c0, %c0_0, %c0_1] : memref<2x4x256xf32, #tpu.memory_space<vmem>>, vector<1x4x256xf32>
    %1 = vector.shape_cast %0 : vector<1x4x256xf32> to vector<4x256xf32>
    %cst = arith.constant dense<0.000000e+00> : vector<4xf32>
    %2 = vector.multi_reduction <add>, %1, %cst [1] : vector<4x256xf32> to vector<4xf32>
    %3 = vector.shape_cast %2 : vector<4xf32> to vector<4x1xf32>
    "tpu.trace_start"() <{level = 10 : i32, message = "ct,dt->cd"}> : () -> ()
    %cst_2 = arith.constant dense<0.000000e+00> : vector<4x4xf32>
    %4 = tpu.matmul %1, %1, %cst_2 {dimension_numbers = #tpu.dot_dimension_numbers<[1], [1], [0], [0], [0, 0, 1, 0], [], []>} : vector<4x256xf32>, vector<4x256xf32>, vector<4x4xf32> -> vector<4x4xf32>
    "tpu.trace_stop"() : () -> ()
    %c1 = arith.constant 1 : index
    %c0_3 = arith.constant 0 : index
    %c0_4 = arith.constant 0 : index
    %5 = vector.load %arg2[%c1, %c0_3, %c0_4] : memref<2x4x256xf32, #tpu.memory_space<vmem>>, vector<1x4x256xf32>
    %6 = vector.shape_cast %5 : vector<1x4x256xf32> to vector<4x256xf32>
    %cst_5 = arith.constant dense<0.000000e+00> : vector<4xf32>
    %7 = vector.multi_reduction <add>, %6, %cst_5 [1] : vector<4x256xf32> to vector<4xf32>
    %8 = vector.shape_cast %7 : vector<4xf32> to vector<4x1xf32>
    "tpu.trace_start"() <{level = 10 : i32, message = "ct,dt->cd"}> : () -> ()
    %cst_6 = arith.constant dense<0.000000e+00> : vector<4x4xf32>
    %9 = tpu.matmul %6, %6, %cst_6 {dimension_numbers = #tpu.dot_dimension_numbers<[1], [1], [0], [0], [0, 0, 1, 0], [], []>} : vector<4x256xf32>, vector<4x256xf32>, vector<4x4xf32> -> vector<4x4xf32>
    "tpu.trace_stop"() : () -> ()
    %10 = arith.addf %3, %8 : vector<4x1xf32>
    %11 = arith.addf %4, %9 : vector<4x4xf32>
    %c0_7 = arith.constant 0 : index
    %c0_8 = arith.constant 0 : index
    %c0_9 = arith.constant 0 : index
    %c0_10 = arith.constant 0 : index
    %12 = vector.load %arg3[%c0_7, %c0_8, %c0_9, %c0_10] : memref<1x1x4x1xf32, #tpu.memory_space<vmem>>, vector<1x1x4x1xf32>
    %13 = vector.shape_cast %12 : vector<1x1x4x1xf32> to vector<4x1xf32>
    %14 = vector.shape_cast %10 : vector<4x1xf32> to vector<1x1x4x1xf32>
    tpu.vector_store %arg3[%c0_7, %c0_8, %c0_9, %c0_10], %14 {strides = array<i32>} : memref<1x1x4x1xf32, #tpu.memory_space<vmem>>, vector<1x1x4x1xf32>,
    %c0_11 = arith.constant 0 : index
    %c0_12 = arith.constant 0 : index
    %c0_13 = arith.constant 0 : index
    %c0_14 = arith.constant 0 : index
    %15 = vector.load %arg4[%c0_11, %c0_12, %c0_13, %c0_14] : memref<1x1x4x4xf32, #tpu.memory_space<vmem>>, vector<1x1x4x4xf32>
    %16 = vector.shape_cast %15 : vector<1x1x4x4xf32> to vector<4x4xf32>
    %17 = vector.shape_cast %11 : vector<4x4xf32> to vector<1x1x4x4xf32>
    tpu.vector_store %arg4[%c0_11, %c0_12, %c0_13, %c0_14], %17 {strides = array<i32>} : memref<1x1x4x4xf32, #tpu.memory_space<vmem>>, vector<1x1x4x4xf32>,
    return
  }
  func.func @transform_0(%arg0: i32, %arg1: i32) -> (i32, i32, i32) {
    %c0_i32 = arith.constant 0 : i32
    %c0_i32_0 = arith.constant 0 : i32
    return %arg0, %c0_i32, %arg1 : i32, i32, i32
  }
  func.func @transform_1(%arg0: i32, %arg1: i32) -> (i32, i32, i32, i32) {
    %c0_i32 = arith.constant 0 : i32
    %c0_i32_0 = arith.constant 0 : i32
    %c0_i32_1 = arith.constant 0 : i32
    return %arg0, %arg1, %c0_i32, %c0_i32_0 : i32, i32, i32, i32
  }
  func.func @transform_2(%arg0: i32, %arg1: i32) -> (i32, i32, i32, i32) {
    %c0_i32 = arith.constant 0 : i32
    %c0_i32_0 = arith.constant 0 : i32
    %c0_i32_1 = arith.constant 0 : i32
    return %arg0, %arg1, %c0_i32, %c0_i32_0 : i32, i32, i32, i32
  }
}

</mosaic_0001>

<llo_original>
// kernel: tpu_custom_call.1
$region0: #{tpu_custom_call.1}
  #allocation0 [shape = 'u32[]', space=smem, size = 0x4, offset = 0x4, fixed_abs, tag = 'smem constant byte address 0x4 - core index']
  #allocation1 [shape = 'u32[72,128]{1,0:T(1,128)}', space=vmem, size = 0x9000, scoped, tag = 'internal scratch']
  %s0 = inlined_call_operand.hbm [shape: f32[2,4,256], index: 0, kind: input, shape index: {}]
  %s1 = inlined_call_operand.vmem [shape: f32[1,1,4,1], index: 1, kind: output, shape index: {0}]
  %s2 = inlined_call_operand.hbm [shape: f32[1,1,4,4], index: 2, kind: output, shape index: {1}]
  %3 = xla_tuple %s1, %s2
  %s4 = sld [smem:[#allocation0]]
  $region26: #{tpu_custom_call.1} parent=0
    _
  %s6 = ssub.s32 1, %s4
  %s7 = scalar_select 0, %s6, %s4
  $region1: #{tpu_custom_call.1} parent=0
    #allocation2 [shape = 'u8[8192]{0}', space=vmem, size = 0x2000, scoped, tag = 'input window, operand 0, single buffered']
    #allocation3 [shape = 's32[1]{0}', space=sflag, size = 0x4, scoped, tag = 'scoped memory for tpu_custom_call.1']
    #allocation4 [shape = 's32[1]{0}', space=sflag, size = 0x4, scoped, tag = 'scoped memory for tpu_custom_call.1']
    #allocation5 [shape = 'u8[2048]{0}', space=vmem, size = 0x800, scoped, tag = 'output window, operand 1, single buffered']
    %8 = vsyncpa [#allocation3], 0
    %9 = vsyncpa [#allocation4], 0
    // Predicated region
    $region2: #{tpu_custom_call.1} parent=1 // pred_check
      _
    $region3: #{tpu_custom_call.1} parent=1 // pred_check_branch
      %11 = sbr.rel (0) target = $region5
    $region4: #{tpu_custom_call.1} parent=1 // pred_region
      %13 = vsyncadd [#allocation3], 0
      %s14 = sshll.u32 %s0, 4
      %s15 = int_to_ptr.hbm [resolvable:$true] %s14
      %s16 = sshll.u32 [#allocation2], 4
      %s17 = int_to_ptr.vmem [resolvable:$true] %s16
      %22 = dma.hbm_to_vmem [thread:$0]  %s15, 256, %s17, [#allocation3], 128, 128, 8
    $region5: #{tpu_custom_call.1} parent=1 // pred_fallthru
      _
    // Predicated region
    $region6: #{tpu_custom_call.1} parent=1 // pred_check
      _
    $region7: #{tpu_custom_call.1} parent=1 // pred_check_branch
      %24 = sbr.rel (0) target = $region9
    $region8: #{tpu_custom_call.1} parent=1 // pred_region
      %26 = dma.done [#allocation3], 256
    $region9: #{tpu_custom_call.1} parent=1 // pred_fallthru
      _
    %v27 = vld [vmem:[#allocation2] sm:$0xff]
    %29 = vst [vmem:[#allocation1] ss:$2 sm:$0xff] %v27
    %v30 = vld.sshfl [vmem:[#allocation1] sm:$0xff pattern:$0x75316420]
    %v31 = vld.sshfl [vmem:[#allocation1 + $0x8] sm:$0xff pattern:$0x75316420]
    %vm34 = vcmask 1043456
    %v35 = vsel %vm34, %v30, 0.0
    %v36 = vsel %vm34, %v31, 0.0
    %v37 = vadd.f32 %v35, %v36
    %38 = vadd.xlane.f32.xlu0 %v37
    %v39 = vpop.xlane.xlu0 %38
    %s40 = scalar_lea.vmem [#allocation2], 8
    %v41 = vld [vmem:[%s40] sm:$0xff]
    %43 = vst [vmem:[#allocation1] ss:$2 sm:$0xff] %v41
    %v44 = vld.sshfl [vmem:[#allocation1] sm:$0xff pattern:$0x75316420]
    %v45 = vld.sshfl [vmem:[#allocation1 + $0x8] sm:$0xff pattern:$0x75316420]
    %v48 = vsel %vm34, %v44, 0.0
    %v49 = vsel %vm34, %v45, 0.0
    %v50 = vadd.f32 %v48, %v49
    %51 = vadd.xlane.f32.xlu0 %v50
    %v52 = vpop.xlane.xlu0 %51
    %53 = vst [vmem:[#allocation1] ss:$2 sm:$0xff] %v41
    %v54 = vld.sshfl [vmem:[#allocation1] sm:$0xff pattern:$0x75316420]
    %v55 = vld.sshfl [vmem:[#allocation1 + $0x8] sm:$0xff pattern:$0x75316420]
    %58 = vst [vmem:[#allocation1] ss:$2 sm:$0xff] %v41
    %v59 = vld.sshfl [vmem:[#allocation1] sm:$0xff pattern:$0x75316420]
    %v60 = vld.sshfl [vmem:[#allocation1 + $0x8] sm:$0xff pattern:$0x75316420]
    %63 = vmatpush.xpose.msra.mxu0 0.0
    %64 = vmatpush.xpose.msra.mxu0 0.0
    %65 = vmatpush.xpose.msra.mxu0 0.0
    %66 = vmatpush.xpose.msra.mxu0 0.0
    %67 = vmatpush.xpose.msra.mxu0 0.0
    %68 = vmatpush.xpose.msra.mxu0 0.0
    %69 = vmatpush.xpose.msra.mxu0 0.0
    %70 = vmatpush.xpose.msra.mxu0 0.0
    %71 = vmatpush.xpose.msra.mxu0 0.0
    %72 = vmatpush.xpose.msra.mxu0 0.0
    %73 = vmatpush.xpose.msra.mxu0 0.0
    %74 = vmatpush.xpose.msra.mxu0 0.0
    %75 = vmatpush.xpose.msra.mxu0 0.0
    %76 = vmatpush.xpose.msra.mxu0 0.0
    %77 = vmatpush.xpose.msra.mxu0 0.0
    %78 = vmatpush.xpose.msra.mxu0 %v59
    %79 = vmatmul.f32.gmra.mxu0 %v54
    %v80 = vpop.f32.mrf.mxu0
    %v81 = vadd.f32 0.0, %v80
    %82 = vdwg.mxu0
    %83 = vmatpush.xpose.msra.mxu0 0.0
    %84 = vmatpush.xpose.msra.mxu0 0.0
    %85 = vmatpush.xpose.msra.mxu0 0.0
    %86 = vmatpush.xpose.msra.mxu0 0.0
    %87 = vmatpush.xpose.msra.mxu0 0.0
    %88 = vmatpush.xpose.msra.mxu0 0.0
    %89 = vmatpush.xpose.msra.mxu0 0.0
    %90 = vmatpush.xpose.msra.mxu0 0.0
    %91 = vmatpush.xpose.msra.mxu0 0.0
    %92 = vmatpush.xpose.msra.mxu0 0.0
    %93 = vmatpush.xpose.msra.mxu0 0.0
    %94 = vmatpush.xpose.msra.mxu0 0.0
    %95 = vmatpush.xpose.msra.mxu0 0.0
    %96 = vmatpush.xpose.msra.mxu0 0.0
    %97 = vmatpush.xpose.msra.mxu0 0.0
    %98 = vmatpush.xpose.msra.mxu0 %v60
    %99 = vmatmul.f32.gmra.mxu0 %v55
    %v100 = vpop.f32.mrf.mxu0
    %v101 = vadd.f32 %v81, %v100
    %102 = vdwg.mxu0
    %v103 = vadd.f32 %v39, %v52
    %104 = vst [vmem:[#allocation1] ss:$2 sm:$0xff] %v27
    %v105 = vld.sshfl [vmem:[#allocation1] sm:$0xff pattern:$0x75316420]
    %v106 = vld.sshfl [vmem:[#allocation1 + $0x8] sm:$0xff pattern:$0x75316420]
    %109 = vst [vmem:[#allocation1] ss:$2 sm:$0xff] %v27
    %v110 = vld.sshfl [vmem:[#allocation1] sm:$0xff pattern:$0x75316420]
    %v111 = vld.sshfl [vmem:[#allocation1 + $0x8] sm:$0xff pattern:$0x75316420]
    %114 = vmatpush.xpose.msra.mxu0 0.0
    %115 = vmatpush.xpose.msra.mxu0 0.0
    %116 = vmatpush.xpose.msra.mxu0 0.0
    %117 = vmatpush.xpose.msra.mxu0 0.0
    %118 = vmatpush.xpose.msra.mxu0 0.0
    %119 = vmatpush.xpose.msra.mxu0 0.0
    %120 = vmatpush.xpose.msra.mxu0 0.0
    %121 = vmatpush.xpose.msra.mxu0 0.0
    %122 = vmatpush.xpose.msra.mxu0 0.0
    %123 = vmatpush.xpose.msra.mxu0 0.0
    %124 = vmatpush.xpose.msra.mxu0 0.0
    %125 = vmatpush.xpose.msra.mxu0 0.0
    %126 = vmatpush.xpose.msra.mxu0 0.0
    %127 = vmatpush.xpose.msra.mxu0 0.0
    %128 = vmatpush.xpose.msra.mxu0 0.0
    %129 = vmatpush.xpose.msra.mxu0 %v110
    %130 = vmatmul.f32.gmra.mxu0 %v105
    %v131 = vpop.f32.mrf.mxu0
    %v132 = vadd.f32 %v101, %v131
    %133 = vdwg.mxu0
    %134 = vmatpush.xpose.msra.mxu0 0.0
    %135 = vmatpush.xpose.msra.mxu0 0.0
    %136 = vmatpush.xpose.msra.mxu0 0.0
    %137 = vmatpush.xpose.msra.mxu0 0.0
    %138 = vmatpush.xpose.msra.mxu0 0.0
    %139 = vmatpush.xpose.msra.mxu0 0.0
    %140 = vmatpush.xpose.msra.mxu0 0.0
    %141 = vmatpush.xpose.msra.mxu0 0.0
    %142 = vmatpush.xpose.msra.mxu0 0.0
    %143 = vmatpush.xpose.msra.mxu0 0.0
    %144 = vmatpush.xpose.msra.mxu0 0.0
    %145 = vmatpush.xpose.msra.mxu0 0.0
    %146 = vmatpush.xpose.msra.mxu0 0.0
    %147 = vmatpush.xpose.msra.mxu0 0.0
    %148 = vmatpush.xpose.msra.mxu0 0.0
    %149 = vmatpush.xpose.msra.mxu0 %v111
    %150 = vmatmul.f32.gmra.mxu0 %v106
    %v151 = vpop.f32.mrf.mxu0
    %v152 = vadd.f32 %v132, %v151
    %153 = vdwg.mxu0
    %vm154 = vcmask 3072
    %155 = vst.msk [vmem:[%s1] sm:$0xf] %vm154, %v103
    %vm156 = vcmask 27648
    %157 = vst.msk [vmem:[#allocation5] sm:$0xf] %vm156, %v152
    // Predicated region
    $region10: #{tpu_custom_call.1} parent=1 // pred_check
      _
    $region11: #{tpu_custom_call.1} parent=1 // pred_check_branch
      %159 = sbr.rel (0) target = $region13
    $region12: #{tpu_custom_call.1} parent=1 // pred_region
      _
    $region13: #{tpu_custom_call.1} parent=1 // pred_fallthru
      _
    // Predicated region
    $region14: #{tpu_custom_call.1} parent=1 // pred_check
      _
    $region15: #{tpu_custom_call.1} parent=1 // pred_check_branch
      %161 = sbr.rel (0) target = $region17
    $region16: #{tpu_custom_call.1} parent=1 // pred_region
      %163 = vsyncadd [#allocation4], 0
      %s165 = sshll.u32 [#allocation5], 4
      %s166 = int_to_ptr.vmem [resolvable:$true] %s165
      %s167 = sshll.u32 %s2, 4
      %s168 = int_to_ptr.hbm [resolvable:$true] %s167
      %170 = dma.vmem_to_hbm [thread:$0]  %s166, 64, %s168, [#allocation4]
    $region17: #{tpu_custom_call.1} parent=1 // pred_fallthru
      _
    // Predicated region
    $region18: #{tpu_custom_call.1} parent=1 // pred_check
      _
    $region19: #{tpu_custom_call.1} parent=1 // pred_check_branch
      %172 = sbr.rel (0) target = $region21
    $region20: #{tpu_custom_call.1} parent=1 // pred_region
      _
    $region21: #{tpu_custom_call.1} parent=1 // pred_fallthru
      _
    // Predicated region
    $region22: #{tpu_custom_call.1} parent=1 // pred_check
      _
    $region23: #{tpu_custom_call.1} parent=1 // pred_check_branch
      %174 = sbr.rel (0) target = $region25
    $region24: #{tpu_custom_call.1} parent=1 // pred_region
      %176 = dma.done [#allocation4], 64
    $region25: #{tpu_custom_call.1} parent=1 // pred_fallthru
      _
    %177 = vsyncpa [#allocation3], 1
    %178 = vsyncpa [#allocation4], 1

</llo_original>
